<compile_context>
chip_gen: v7x
topology: tpu7x:2x2x1
jax: 0.10.0
libtpu: 0.0.40
codegen_flags: <defaults>
</compile_context>

<pallas_src>
import math

import jax
import jax.numpy as jnp
from jax import lax
from jax.experimental import pallas as pl
from jax.experimental.pallas import tpu as pltpu

_INV_SQRT2 = 1.0 / math.sqrt(2.0)


def _transition_kernel(xp_ref, ss_ref, wb_ref, o_ref):
    # Static shapes:
    #   xp_ref : (2, N, C_in, T)    even/odd L-phases stacked (phase = leading axis),
    #                               lane axis = T pooled positions (lane-dense)
    #   ss_ref : (C_in, 2)          folded BatchNorm [scale | shift]
    #   wb_ref : (C_out, C_in + 1)  1x1-conv [weight | bias]
    #   o_ref  : (N, C_out, T)
    c_in = xp_ref.shape[2]
    c_out = wb_ref.shape[0]

    scale = ss_ref[:, 0:1]                     # (C_in, 1)  broadcasts along lanes
    shift = ss_ref[:, 1:2]                     # (C_in, 1)
    w = wb_ref[:, :c_in]                       # (C_out, C_in)
    bias = wb_ref[:, c_in:c_in + 1]            # (C_out, 1)

    x = xp_ref[...]                            # (2, N, C_in, T)

    # BatchNorm1d (inference stats, pre-folded) + exact (erf) GELU for PyTorch parity.
    # TODO(synk): switch to tanh-approximate GELU (EUP slot, ~free) if ~1e-3
    # divergence from torch's default erf GELU is acceptable.
    h = x * scale + shift
    h = 0.5 * h * (1.0 + lax.erf(h * _INV_SQRT2))
    # TODO(synk): Dropout(0.25) is identity in eval mode; training-mode stochastic
    # masking (pltpu.prng_*) intentionally omitted.

    # 1x1 conv over channels, both phases + whole batch at once.
    # MAC-volume-aware unit choice: tiny contractions stay on the VPU (a K=8 matmul
    # would leave the MXU ~1% utilized); only genuinely fat channel counts use it.
    if c_in >= 32 and c_in * c_out >= 1024:
        y = jnp.einsum("ok,pnkt->pnot", w, h,
                       preferred_element_type=jnp.float32) + bias
    else:
        # Broadcast-FMA over C_in with independent accumulator chains so the
        # dependent-add chain doesn't serialize the VALU slots.
        n_chains = min(c_in, 2 if c_in < 16 else 4)
        chains = []
        for c0 in range(n_chains):
            acc = h[:, :, c0:c0 + 1, :] * w[:, c0:c0 + 1]        # (2, N, C_out, T)
            for k in range(c0 + n_chains, c_in, n_chains):
                acc = acc + h[:, :, k:k + 1, :] * w[:, k:k + 1]
            chains.append(acc)
        while len(chains) > 1:                                   # tree-sum the chains
            nxt = [chains[i] + chains[i + 1] for i in range(0, len(chains) - 1, 2)]
            if len(chains) % 2:
                nxt.append(chains[-1])
            chains = nxt
        y = chains[0] + bias                                     # (2, N, C_out, T)

    # MaxPool1d(kernel_size=2, stride=2): the pointwise conv commutes with the
    # even/odd de-interleave, so the pool is one dense VPU max of the two phases.
    o_ref[...] = jnp.maximum(y[0], y[1]).astype(o_ref.dtype)


def fold_params(gamma, beta, running_mean, running_var, w, b, eps=1e-5):
    """Fold BatchNorm1d (inference semantics) into per-channel scale/shift and pack
    the conv weight/bias. Hoisted out of the hot path: run once at param-load time."""
    scale = gamma * lax.rsqrt(running_var + eps)
    shift = beta - running_mean * scale
    ss = jnp.stack([scale, shift], axis=1)             # (C_in, 2)
    wb = jnp.concatenate([w, b[:, None]], axis=1)      # (C_out, C_in + 1)
    return ss, wb


def _pick_lane_tile(l_half):
    # Single full-extent block at small L (no per-step pipeline overhead); >=512-lane
    # tiles at large L (~85% of HBM roofline) and a parallel axis for v7x's dual TCs.
    if l_half <= 2048:
        return l_half
    for t in (2048, 1024, 512):
        if l_half % t == 0:
            return t
    return l_half


@jax.jit
def transition_block(x, ss, wb):
    """x: (N, C_in, L) float32 NCL (PyTorch layout). Returns (N, C_out, L // 2) NCL."""
    N, C_in, L = x.shape
    C_out = wb.shape[0]
    assert L % 2 == 0, "MaxPool1d(2, 2) requires even length"
    L_half = L // 2

    # De-interleave L into even/odd phases, stacked into ONE array so the kernel
    # issues a single input DMA (one fused wrapper copy instead of two slice fusions).
    # TODO(synk): for very large L, benchmark an in-kernel pl.ds(..., stride=2) split
    # of the raw x to drop this extra HBM pass entirely.
    xp = jnp.moveaxis(x.reshape(N, C_in, L_half, 2), -1, 0)     # (2, N, C_in, L_half)

    T = _pick_lane_tile(L_half)
    grid = (L_half // T,)   # 1 step at demo size; L-parallel tiles at production size

    return pl.pallas_call(
        _transition_kernel,
        out_shape=jax.ShapeDtypeStruct((N, C_out, L_half), x.dtype),
        grid_spec=pltpu.PrefetchScalarGridSpec(
            num_scalar_prefetch=0,
            grid=grid,
            in_specs=[
                pl.BlockSpec((2, N, C_in, T), lambda l: (0, 0, 0, l)),   # stacked phases
                pl.BlockSpec((C_in, 2), lambda l: (0, 0)),               # BN scale/shift
                pl.BlockSpec((C_out, C_in + 1), lambda l: (0, 0)),       # conv weight/bias
            ],
            out_specs=pl.BlockSpec((N, C_out, T), lambda l: (0, 0, l)),
        ),
        compiler_params=pltpu.CompilerParams(
            dimension_semantics=("parallel",),   # L-tiles independent (dual-TC v7x)
        ),
    )(xp, ss, wb)


if __name__ == "__main__":
    N, C_in, C_out, L = 2, 8, 16, 256
    EPS = 1e-5

    keys = jax.random.split(jax.random.PRNGKey(0), 7)
    x = jax.random.normal(keys[0], (N, C_in, L), jnp.float32)
    # Deterministic synthetic parameters (shapes from the module's __init__)
    gamma = 1.0 + 0.1 * jax.random.normal(keys[1], (C_in,), jnp.float32)
    beta = 0.1 * jax.random.normal(keys[2], (C_in,), jnp.float32)
    running_mean = 0.1 * jax.random.normal(keys[3], (C_in,), jnp.float32)
    running_var = jnp.abs(1.0 + 0.1 * jax.random.normal(keys[4], (C_in,), jnp.float32))
    # nn.Conv1d(C_in, C_out, kernel_size=1): weight (C_out, C_in, 1) -> squeeze (C_out, C_in)
    w = 0.2 * jax.random.normal(keys[5], (C_out, C_in), jnp.float32)
    b = 0.05 * jax.random.normal(keys[6], (C_out,), jnp.float32)

    ss, wb = fold_params(gamma, beta, running_mean, running_var, w, b, eps=EPS)

    out = transition_block(x, ss, wb)
    out = jax.block_until_ready(out)

    # Pure-JAX reference (same math, NCL layout, eval-mode dropout)
    def reference(x):
        h = (x - running_mean[None, :, None]) / jnp.sqrt(running_var[None, :, None] + EPS)
        h = h * gamma[None, :, None] + beta[None, :, None]
        h = 0.5 * h * (1.0 + lax.erf(h / jnp.sqrt(2.0)))
        y = jnp.einsum("oc,ncl->nol", w, h) + b[None, :, None]
        return y.reshape(N, C_out, L // 2, 2).max(-1)

    expected = reference(x)
    assert out.shape == (N, C_out, L // 2), out.shape
    assert jnp.allclose(out, expected, atol=1e-4, rtol=1e-4), \
        float(jnp.max(jnp.abs(out - expected)))
    print("KERNEL_OK")
</pallas_src>

<mosaic_0001>
module attributes {stable_mosaic.version = 11 : i64} {
  func.func @_transition_kernel(%arg0: i32, %arg1: memref<2x2x8x128xf32, #tpu.memory_space<vmem>>, %arg2: memref<8x2xf32, #tpu.memory_space<vmem>>, %arg3: memref<16x9xf32, #tpu.memory_space<vmem>>, %arg4: memref<2x16x128xf32, #tpu.memory_space<vmem>>) attributes {dimension_semantics = [#tpu.dimension_semantics<parallel>], iteration_bounds = array<i64: 1>, scalar_prefetch = 0 : i64, scratch_operands = 0 : i64, tpu.core_type = #tpu.core_type<tc>, window_params = [{transform_indices = @transform_0, window_bounds = array<i64: 2, 2, 8, 128>}, {pipeline_mode = #tpu.pipeline_mode<synchronous>, transform_indices = @transform_1, window_bounds = array<i64: 8, 2>}, {pipeline_mode = #tpu.pipeline_mode<synchronous>, transform_indices = @transform_2, window_bounds = array<i64: 16, 9>}, {transform_indices = @transform_3, window_bounds = array<i64: 2, 16, 128>}]} {
    %c0 = arith.constant 0 : index
    %c0_0 = arith.constant 0 : index
    %0 = vector.load %arg2[%c0, %c0_0] : memref<8x2xf32, #tpu.memory_space<vmem>>, vector<8x1xf32>
    %c0_1 = arith.constant 0 : index
    %c1 = arith.constant 1 : index
    %1 = vector.load %arg2[%c0_1, %c1] : memref<8x2xf32, #tpu.memory_space<vmem>>, vector<8x1xf32>
    %c0_2 = arith.constant 0 : index
    %c0_3 = arith.constant 0 : index
    %2 = vector.load %arg3[%c0_2, %c0_3] : memref<16x9xf32, #tpu.memory_space<vmem>>, vector<16x8xf32>
    %c0_4 = arith.constant 0 : index
    %c8 = arith.constant 8 : index
    %3 = vector.load %arg3[%c0_4, %c8] : memref<16x9xf32, #tpu.memory_space<vmem>>, vector<16x1xf32>
    %c0_5 = arith.constant 0 : index
    %c0_6 = arith.constant 0 : index
    %c0_7 = arith.constant 0 : index
    %c0_8 = arith.constant 0 : index
    %4 = vector.load %arg1[%c0_5, %c0_6, %c0_7, %c0_8] : memref<2x2x8x128xf32, #tpu.memory_space<vmem>>, vector<2x2x8x128xf32>
    %5 = vector.shape_cast %0 : vector<8x1xf32> to vector<1x1x8x1xf32>
    %6 = vector.broadcast %5 : vector<1x1x8x1xf32> to vector<2x2x8x128xf32>
    %7 = arith.mulf %4, %6 : vector<2x2x8x128xf32>
    %8 = vector.shape_cast %1 : vector<8x1xf32> to vector<1x1x8x1xf32>
    %9 = vector.broadcast %8 : vector<1x1x8x1xf32> to vector<2x2x8x128xf32>
    %10 = arith.addf %7, %9 : vector<2x2x8x128xf32>
    %cst = arith.constant 5.000000e-01 : f32
    %11 = vector.broadcast %cst : f32 to vector<2x2x8x128xf32>
    %12 = arith.mulf %11, %10 : vector<2x2x8x128xf32>
    %cst_9 = arith.constant 0.707106769 : f32
    %13 = vector.broadcast %cst_9 : f32 to vector<2x2x8x128xf32>
    %14 = arith.mulf %10, %13 : vector<2x2x8x128xf32>
    %15 = math.erf %14 : vector<2x2x8x128xf32>
    %cst_10 = arith.constant 1.000000e+00 : f32
    %16 = vector.broadcast %cst_10 : f32 to vector<2x2x8x128xf32>
    %17 = arith.addf %16, %15 : vector<2x2x8x128xf32>
    %18 = arith.mulf %12, %17 : vector<2x2x8x128xf32>
    %19 = vector.extract_strided_slice %18 {offsets = [0, 0, 0, 0], sizes = [2, 2, 1, 128], strides = [1, 1, 1, 1]} : vector<2x2x8x128xf32> to vector<2x2x1x128xf32>
    %20 = vector.extract_strided_slice %2 {offsets = [0, 0], sizes = [16, 1], strides = [1, 1]} : vector<16x8xf32> to vector<16x1xf32>
    %21 = vector.shape_cast %20 : vector<16x1xf32> to vector<1x1x16x1xf32>
    %22 = vector.broadcast %19 : vector<2x2x1x128xf32> to vector<2x2x16x128xf32>
    %23 = vector.broadcast %21 : vector<1x1x16x1xf32> to vector<2x2x16x128xf32>
    %24 = arith.mulf %22, %23 : vector<2x2x16x128xf32>
    %25 = vector.extract_strided_slice %18 {offsets = [0, 0, 2, 0], sizes = [2, 2, 1, 128], strides = [1, 1, 1, 1]} : vector<2x2x8x128xf32> to vector<2x2x1x128xf32>
    %26 = vector.extract_strided_slice %2 {offsets = [0, 2], sizes = [16, 1], strides = [1, 1]} : vector<16x8xf32> to vector<16x1xf32>
    %27 = vector.shape_cast %26 : vector<16x1xf32> to vector<1x1x16x1xf32>
    %28 = vector.broadcast %25 : vector<2x2x1x128xf32> to vector<2x2x16x128xf32>
    %29 = vector.broadcast %27 : vector<1x1x16x1xf32> to vector<2x2x16x128xf32>
    %30 = arith.mulf %28, %29 : vector<2x2x16x128xf32>
    %31 = arith.addf %24, %30 : vector<2x2x16x128xf32>
    %32 = vector.extract_strided_slice %18 {offsets = [0, 0, 4, 0], sizes = [2, 2, 1, 128], strides = [1, 1, 1, 1]} : vector<2x2x8x128xf32> to vector<2x2x1x128xf32>
    %33 = vector.extract_strided_slice %2 {offsets = [0, 4], sizes = [16, 1], strides = [1, 1]} : vector<16x8xf32> to vector<16x1xf32>
    %34 = vector.shape_cast %33 : vector<16x1xf32> to vector<1x1x16x1xf32>
    %35 = vector.broadcast %32 : vector<2x2x1x128xf32> to vector<2x2x16x128xf32>
    %36 = vector.broadcast %34 : vector<1x1x16x1xf32> to vector<2x2x16x128xf32>
    %37 = arith.mulf %35, %36 : vector<2x2x16x128xf32>
    %38 = arith.addf %31, %37 : vector<2x2x16x128xf32>
    %39 = vector.extract_strided_slice %18 {offsets = [0, 0, 6, 0], sizes = [2, 2, 1, 128], strides = [1, 1, 1, 1]} : vector<2x2x8x128xf32> to vector<2x2x1x128xf32>
    %40 = vector.extract_strided_slice %2 {offsets = [0, 6], sizes = [16, 1], strides = [1, 1]} : vector<16x8xf32> to vector<16x1xf32>
    %41 = vector.shape_cast %40 : vector<16x1xf32> to vector<1x1x16x1xf32>
    %42 = vector.broadcast %39 : vector<2x2x1x128xf32> to vector<2x2x16x128xf32>
    %43 = vector.broadcast %41 : vector<1x1x16x1xf32> to vector<2x2x16x128xf32>
    %44 = arith.mulf %42, %43 : vector<2x2x16x128xf32>
    %45 = arith.addf %38, %44 : vector<2x2x16x128xf32>
    %46 = vector.extract_strided_slice %18 {offsets = [0, 0, 1, 0], sizes = [2, 2, 1, 128], strides = [1, 1, 1, 1]} : vector<2x2x8x128xf32> to vector<2x2x1x128xf32>
    %47 = vector.extract_strided_slice %2 {offsets = [0, 1], sizes = [16, 1], strides = [1, 1]} : vector<16x8xf32> to vector<16x1xf32>
    %48 = vector.shape_cast %47 : vector<16x1xf32> to vector<1x1x16x1xf32>
    %49 = vector.broadcast %46 : vector<2x2x1x128xf32> to vector<2x2x16x128xf32>
    %50 = vector.broadcast %48 : vector<1x1x16x1xf32> to vector<2x2x16x128xf32>
    %51 = arith.mulf %49, %50 : vector<2x2x16x128xf32>
    %52 = vector.extract_strided_slice %18 {offsets = [0, 0, 3, 0], sizes = [2, 2, 1, 128], strides = [1, 1, 1, 1]} : vector<2x2x8x128xf32> to vector<2x2x1x128xf32>
    %53 = vector.extract_strided_slice %2 {offsets = [0, 3], sizes = [16, 1], strides = [1, 1]} : vector<16x8xf32> to vector<16x1xf32>
    %54 = vector.shape_cast %53 : vector<16x1xf32> to vector<1x1x16x1xf32>
    %55 = vector.broadcast %52 : vector<2x2x1x128xf32> to vector<2x2x16x128xf32>
    %56 = vector.broadcast %54 : vector<1x1x16x1xf32> to vector<2x2x16x128xf32>
    %57 = arith.mulf %55, %56 : vector<2x2x16x128xf32>
    %58 = arith.addf %51, %57 : vector<2x2x16x128xf32>
    %59 = vector.extract_strided_slice %18 {offsets = [0, 0, 5, 0], sizes = [2, 2, 1, 128], strides = [1, 1, 1, 1]} : vector<2x2x8x128xf32> to vector<2x2x1x128xf32>
    %60 = vector.extract_strided_slice %2 {offsets = [0, 5], sizes = [16, 1], strides = [1, 1]} : vector<16x8xf32> to vector<16x1xf32>
    %61 = vector.shape_cast %60 : vector<16x1xf32> to vector<1x1x16x1xf32>
    %62 = vector.broadcast %59 : vector<2x2x1x128xf32> to vector<2x2x16x128xf32>
    %63 = vector.broadcast %61 : vector<1x1x16x1xf32> to vector<2x2x16x128xf32>
    %64 = arith.mulf %62, %63 : vector<2x2x16x128xf32>
    %65 = arith.addf %58, %64 : vector<2x2x16x128xf32>
    %66 = vector.extract_strided_slice %18 {offsets = [0, 0, 7, 0], sizes = [2, 2, 1, 128], strides = [1, 1, 1, 1]} : vector<2x2x8x128xf32> to vector<2x2x1x128xf32>
    %67 = vector.extract_strided_slice %2 {offsets = [0, 7], sizes = [16, 1], strides = [1, 1]} : vector<16x8xf32> to vector<16x1xf32>
    %68 = vector.shape_cast %67 : vector<16x1xf32> to vector<1x1x16x1xf32>
    %69 = vector.broadcast %66 : vector<2x2x1x128xf32> to vector<2x2x16x128xf32>
    %70 = vector.broadcast %68 : vector<1x1x16x1xf32> to vector<2x2x16x128xf32>
    %71 = arith.mulf %69, %70 : vector<2x2x16x128xf32>
    %72 = arith.addf %65, %71 : vector<2x2x16x128xf32>
    %73 = arith.addf %45, %72 : vector<2x2x16x128xf32>
    %74 = vector.shape_cast %3 : vector<16x1xf32> to vector<1x1x16x1xf32>
    %75 = vector.broadcast %74 : vector<1x1x16x1xf32> to vector<2x2x16x128xf32>
    %76 = arith.addf %73, %75 : vector<2x2x16x128xf32>
    %77 = vector.extract_strided_slice %76 {offsets = [0, 0, 0, 0], sizes = [1, 2, 16, 128], strides = [1, 1, 1, 1]} : vector<2x2x16x128xf32> to vector<1x2x16x128xf32>
    %78 = vector.shape_cast %77 : vector<1x2x16x128xf32> to vector<2x16x128xf32>
    %79 = vector.extract_strided_slice %76 {offsets = [1, 0, 0, 0], sizes = [1, 2, 16, 128], strides = [1, 1, 1, 1]} : vector<2x2x16x128xf32> to vector<1x2x16x128xf32>
    %80 = vector.shape_cast %79 : vector<1x2x16x128xf32> to vector<2x16x128xf32>
    %81 = arith.maximumf %78, %80 : vector<2x16x128xf32>
    %c0_11 = arith.constant 0 : index
    %c0_12 = arith.constant 0 : index
    %c0_13 = arith.constant 0 : index
    %82 = vector.load %arg4[%c0_11, %c0_12, %c0_13] : memref<2x16x128xf32, #tpu.memory_space<vmem>>, vector<2x16x128xf32>
    tpu.vector_store %arg4[%c0_11, %c0_12, %c0_13], %81 {strides = array<i32>} : memref<2x16x128xf32, #tpu.memory_space<vmem>>, vector<2x16x128xf32>,
    return
  }
  func.func @transform_0(%arg0: i32) -> (i32, i32, i32, i32) {
    %c0_i32 = arith.constant 0 : i32
    %c0_i32_0 = arith.constant 0 : i32
    %c0_i32_1 = arith.constant 0 : i32
    %c0_i32_2 = arith.constant 0 : i32
    return %c0_i32, %c0_i32_0, %c0_i32_1, %arg0 : i32, i32, i32, i32
  }
  func.func @transform_1(%arg0: i32) -> (i32, i32) {
    %c0_i32 = arith.constant 0 : i32
    %c0_i32_0 = arith.constant 0 : i32
    %c0_i32_1 = arith.constant 0 : i32
    return %c0_i32, %c0_i32_0 : i32, i32
  }
  func.func @transform_2(%arg0: i32) -> (i32, i32) {
    %c0_i32 = arith.constant 0 : i32
    %c0_i32_0 = arith.constant 0 : i32
    %c0_i32_1 = arith.constant 0 : i32
    return %c0_i32, %c0_i32_0 : i32, i32
  }
  func.func @transform_3(%arg0: i32) -> (i32, i32, i32) {
    %c0_i32 = arith.constant 0 : i32
    %c0_i32_0 = arith.constant 0 : i32
    %c0_i32_1 = arith.constant 0 : i32
    return %c0_i32, %c0_i32_0, %arg0 : i32, i32, i32
  }
}

</mosaic_0001>

<llo_original>
// kernel: transition_block.1
$region0: #{transition_block.1}
  #allocation0 [shape = 'u32[]', space=smem, size = 0x4, offset = 0x4, fixed_abs, tag = 'smem constant byte address 0x4 - core index']
  #allocation1 [shape = 'u32[144,128]{1,0:T(1,128)}', space=vmem, size = 0x12000, scoped, tag = 'internal scratch']
  %s0 = inlined_call_operand.vmem [shape: f32[2,2,8,128], index: 0, kind: input, shape index: {}]
  %s1 = inlined_call_operand.vmem [shape: f32[8,2], index: 1, kind: input, shape index: {}]
  %s2 = inlined_call_operand.vmem [shape: f32[16,9], index: 2, kind: input, shape index: {}]
  %s3 = inlined_call_operand.hbm [shape: f32[2,16,128], index: 3, kind: output, shape index: {}]
  %s4 = sld [smem:[#allocation0]]
  $region22: #{transition_block.1} parent=0
    _
  %s6 = ssub.s32 1, %s4
  %s7 = scalar_select 0, %s6, %s4
  $region1: #{transition_block.1} parent=0
    #allocation2 [shape = 'u8[16384]{0}', space=vmem, size = 0x4000, scoped, tag = 'output window, operand 0, single buffered']
    #allocation3 [shape = 's32[1]{0}', space=sflag, size = 0x4, scoped, tag = 'scoped memory for transition_block.1']
    %8 = vsyncpa [#allocation3], 0
    // Predicated region
    $region2: #{transition_block.1} parent=1 // pred_check
      _
    $region3: #{transition_block.1} parent=1 // pred_check_branch
      %10 = sbr.rel (0) target = $region5
    $region4: #{transition_block.1} parent=1 // pred_region
      _
    $region5: #{transition_block.1} parent=1 // pred_fallthru
      _
    // Predicated region
    $region6: #{transition_block.1} parent=1 // pred_check
      _
    $region7: #{transition_block.1} parent=1 // pred_check_branch
      %12 = sbr.rel (0) target = $region9
    $region8: #{transition_block.1} parent=1 // pred_region
      _
    $region9: #{transition_block.1} parent=1 // pred_fallthru
      _
    // Predicated region
    $region10: #{transition_block.1} parent=1 // pred_check
      _
    $region11: #{transition_block.1} parent=1 // pred_check_branch
      %14 = sbr.rel (0) target = $region13
    $region12: #{transition_block.1} parent=1 // pred_region
      _
    $region13: #{transition_block.1} parent=1 // pred_fallthru
      _
    %v15 = vld [vmem:[%s1] sm:$0xff]
    %v16 = vld [vmem:[%s2] sm:$0xff]
    %v17 = vld [vmem:[%s2 + $0x8] sm:$0xff]
    %v18 = vld [vmem:[%s0] sm:$0xff]
    %v19 = vld [vmem:[%s0 + $0x8] sm:$0xff]
    %v20 = vld [vmem:[%s0 + $0x10] sm:$0xff]
    %v21 = vld [vmem:[%s0 + $0x18] sm:$0xff]
    %23 = vset.pattern.permute.xlu0 0
    %24 = vperm.xlu0 %23, %v15
    %v25 = vpop.permute.xlu0 %24
    %v27 = vmul.f32 %v18, %v25
    %v28 = vmul.f32 %v19, %v25
    %v29 = vmul.f32 %v20, %v25
    %v30 = vmul.f32 %v21, %v25
    %31 = vset.pattern.permute.xlu0 1
    %32 = vperm.xlu0 %31, %v15
    %v33 = vpop.permute.xlu0 %32
    %v35 = vadd.f32 %v27, %v33
    %v36 = vadd.f32 %v28, %v33
    %v37 = vadd.f32 %v29, %v33
    %v38 = vadd.f32 %v30, %v33
    %v39 = vmul.f32 %v35, 0.5
    %v40 = vmul.f32 %v36, 0.5
    %v41 = vmul.f32 %v37, 0.5
    %v42 = vmul.f32 %v38, 0.5
    %v43 = vmul.f32 %v35, 0.70710677
    %v44 = vmul.f32 %v36, 0.70710677
    %v45 = vmul.f32 %v37, 0.70710677
    %v46 = vmul.f32 %v38, 0.70710677
    %v47 = verf.f32.pop %v43
    %v48 = verf.f32.pop %v44
    %v49 = verf.f32.pop %v45
    %v50 = verf.f32.pop %v46
    %v51 = vadd.f32 %v47, 1.0
    %v52 = vadd.f32 %v48, 1.0
    %v53 = vadd.f32 %v49, 1.0
    %v54 = vadd.f32 %v50, 1.0
    %v55 = vmul.f32 %v39, %v51
    %v56 = vmul.f32 %v40, %v52
    %v57 = vmul.f32 %v41, %v53
    %v58 = vmul.f32 %v42, %v54
    %v59 = vlaneseq
    %v60 = vshrl.u32 %v59, 7
    %v61 = vsub.s32 0, %v60
    %v62 = vrot.slane %v55, %v61
    %v63 = vlaneseq
    %v64 = vshrl.u32 %v63, 7
    %v65 = vsub.s32 0, %v64
    %v66 = vrot.slane %v56, %v65
    %v67 = vlaneseq
    %v68 = vshrl.u32 %v67, 7
    %v69 = vsub.s32 0, %v68
    %v70 = vrot.slane %v57, %v69
    %v71 = vlaneseq
    %v72 = vshrl.u32 %v71, 7
    %v73 = vsub.s32 0, %v72
    %v74 = vrot.slane %v58, %v73
    %76 = vset.pattern.permute.xlu0 0
    %77 = vperm.xlu0 %76, %v16
    %v78 = vpop.permute.xlu0 %77
    %81 = vset.pattern.permute.xlu0 0
    %82 = vperm.xlu0 %81, %v17
    %v83 = vpop.permute.xlu0 %82
    %v85 = vmul.f32 %v62, %v78
    %v86 = vmul.f32 %v62, %v83
    %v87 = vmul.f32 %v66, %v78
    %v88 = vmul.f32 %v66, %v83
    %v89 = vmul.f32 %v70, %v78
    %v90 = vmul.f32 %v70, %v83
    %v91 = vmul.f32 %v74, %v78
    %v92 = vmul.f32 %v74, %v83
    %v93 = vlaneseq
    %v94 = vshrl.u32 %v93, 7
    %v95 = vsub.s32 2, %v94
    %v96 = vrot.slane %v55, %v95
    %v97 = vlaneseq
    %v98 = vshrl.u32 %v97, 7
    %v99 = vsub.s32 2, %v98
    %v100 = vrot.slane %v56, %v99
    %v101 = vlaneseq
    %v102 = vshrl.u32 %v101, 7
    %v103 = vsub.s32 2, %v102
    %v104 = vrot.slane %v57, %v103
    %v105 = vlaneseq
    %v106 = vshrl.u32 %v105, 7
    %v107 = vsub.s32 2, %v106
    %v108 = vrot.slane %v58, %v107
    %109 = vset.pattern.permute.xlu0 2
    %110 = vperm.xlu0 %109, %v16
    %v111 = vpop.permute.xlu0 %110
    %113 = vset.pattern.permute.xlu0 2
    %114 = vperm.xlu0 %113, %v17
    %v115 = vpop.permute.xlu0 %114
    %v117 = vmul.f32 %v96, %v111
    %v118 = vmul.f32 %v96, %v115
    %v119 = vmul.f32 %v100, %v111
    %v120 = vmul.f32 %v100, %v115
    %v121 = vmul.f32 %v104, %v111
    %v122 = vmul.f32 %v104, %v115
    %v123 = vmul.f32 %v108, %v111
    %v124 = vmul.f32 %v108, %v115
    %v125 = vadd.f32 %v85, %v117
    %v126 = vadd.f32 %v86, %v118
    %v127 = vadd.f32 %v87, %v119
    %v128 = vadd.f32 %v88, %v120
    %v129 = vadd.f32 %v89, %v121
    %v130 = vadd.f32 %v90, %v122
    %v131 = vadd.f32 %v91, %v123
    %v132 = vadd.f32 %v92, %v124
    %v133 = vlaneseq
    %v134 = vshrl.u32 %v133, 7
    %v135 = vsub.s32 4, %v134
    %v136 = vrot.slane %v55, %v135
    %v137 = vlaneseq
    %v138 = vshrl.u32 %v137, 7
    %v139 = vsub.s32 4, %v138
    %v140 = vrot.slane %v56, %v139
    %v141 = vlaneseq
    %v142 = vshrl.u32 %v141, 7
    %v143 = vsub.s32 4, %v142
    %v144 = vrot.slane %v57, %v143
    %v145 = vlaneseq
    %v146 = vshrl.u32 %v145, 7
    %v147 = vsub.s32 4, %v146
    %v148 = vrot.slane %v58, %v147
    %149 = vset.pattern.permute.xlu0 4
    %150 = vperm.xlu0 %149, %v16
    %v151 = vpop.permute.xlu0 %150
    %153 = vset.pattern.permute.xlu0 4
    %154 = vperm.xlu0 %153, %v17
    %v155 = vpop.permute.xlu0 %154
    %v157 = vmul.f32 %v136, %v151
    %v158 = vmul.f32 %v136, %v155
    %v159 = vmul.f32 %v140, %v151
    %v160 = vmul.f32 %v140, %v155
    %v161 = vmul.f32 %v144, %v151
    %v162 = vmul.f32 %v144, %v155
    %v163 = vmul.f32 %v148, %v151
    %v164 = vmul.f32 %v148, %v155
    %v165 = vadd.f32 %v125, %v157
    %v166 = vadd.f32 %v126, %v158
    %v167 = vadd.f32 %v127, %v159
    %v168 = vadd.f32 %v128, %v160
    %v169 = vadd.f32 %v129, %v161
    %v170 = vadd.f32 %v130, %v162
    %v171 = vadd.f32 %v131, %v163
    %v172 = vadd.f32 %v132, %v164
    %v173 = vlaneseq
    %v174 = vshrl.u32 %v173, 7
    %v175 = vsub.s32 6, %v174
    %v176 = vrot.slane %v55, %v175
    %v177 = vlaneseq
    %v178 = vshrl.u32 %v177, 7
    %v179 = vsub.s32 6, %v178
    %v180 = vrot.slane %v56, %v179
    %v181 = vlaneseq
    %v182 = vshrl.u32 %v181, 7
    %v183 = vsub.s32 6, %v182
    %v184 = vrot.slane %v57, %v183
    %v185 = vlaneseq
    %v186 = vshrl.u32 %v185, 7
    %v187 = vsub.s32 6, %v186
    %v188 = vrot.slane %v58, %v187
    %189 = vset.pattern.permute.xlu0 6
    %190 = vperm.xlu0 %189, %v16
    %v191 = vpop.permute.xlu0 %190
    %193 = vset.pattern.permute.xlu0 6
    %194 = vperm.xlu0 %193, %v17
    %v195 = vpop.permute.xlu0 %194
    %v197 = vmul.f32 %v176, %v191
    %v198 = vmul.f32 %v176, %v195
    %v199 = vmul.f32 %v180, %v191
    %v200 = vmul.f32 %v180, %v195
    %v201 = vmul.f32 %v184, %v191
    %v202 = vmul.f32 %v184, %v195
    %v203 = vmul.f32 %v188, %v191
    %v204 = vmul.f32 %v188, %v195
    %v205 = vadd.f32 %v165, %v197
    %v206 = vadd.f32 %v166, %v198
    %v207 = vadd.f32 %v167, %v199
    %v208 = vadd.f32 %v168, %v200
    %v209 = vadd.f32 %v169, %v201
    %v210 = vadd.f32 %v170, %v202
    %v211 = vadd.f32 %v171, %v203
    %v212 = vadd.f32 %v172, %v204
    %v213 = vlaneseq
    %v214 = vshrl.u32 %v213, 7
    %v215 = vsub.s32 1, %v214
    %v216 = vrot.slane %v55, %v215
    %v217 = vlaneseq
    %v218 = vshrl.u32 %v217, 7
    %v219 = vsub.s32 1, %v218
    %v220 = vrot.slane %v56, %v219
    %v221 = vlaneseq
    %v222 = vshrl.u32 %v221, 7
    %v223 = vsub.s32 1, %v222
    %v224 = vrot.slane %v57, %v223
    %v225 = vlaneseq
    %v226 = vshrl.u32 %v225, 7
    %v227 = vsub.s32 1, %v226
    %v228 = vrot.slane %v58, %v227
    %229 = vset.pattern.permute.xlu0 1
    %230 = vperm.xlu0 %229, %v16
    %v231 = vpop.permute.xlu0 %230
    %233 = vset.pattern.permute.xlu0 1
    %234 = vperm.xlu0 %233, %v17
    %v235 = vpop.permute.xlu0 %234
    %v237 = vmul.f32 %v216, %v231
    %v238 = vmul.f32 %v216, %v235
    %v239 = vmul.f32 %v220, %v231
    %v240 = vmul.f32 %v220, %v235
    %v241 = vmul.f32 %v224, %v231
    %v242 = vmul.f32 %v224, %v235
    %v243 = vmul.f32 %v228, %v231
    %v244 = vmul.f32 %v228, %v235
    %v245 = vlaneseq
    %v246 = vshrl.u32 %v245, 7
    %v247 = vsub.s32 3, %v246
    %v248 = vrot.slane %v55, %v247
    %v249 = vlaneseq
    %v250 = vshrl.u32 %v249, 7
    %v251 = vsub.s32 3, %v250
    %v252 = vrot.slane %v56, %v251
    %v253 = vlaneseq
    %v254 = vshrl.u32 %v253, 7
    %v255 = vsub.s32 3, %v254
    %v256 = vrot.slane %v57, %v255
    %v257 = vlaneseq
    %v258 = vshrl.u32 %v257, 7
    %v259 = vsub.s32 3, %v258
    %v260 = vrot.slane %v58, %v259
    %261 = vset.pattern.permute.xlu0 3
    %262 = vperm.xlu0 %261, %v16
    %v263 = vpop.permute.xlu0 %262
    %265 = vset.pattern.permute.xlu0 3
    %266 = vperm.xlu0 %265, %v17
    %v267 = vpop.permute.xlu0 %266
    %v269 = vmul.f32 %v248, %v263
    %v270 = vmul.f32 %v248, %v267
    %v271 = vmul.f32 %v252, %v263
    %v272 = vmul.f32 %v252, %v267
    %v273 = vmul.f32 %v256, %v263
    %v274 = vmul.f32 %v256, %v267
    %v275 = vmul.f32 %v260, %v263
    %v276 = vmul.f32 %v260, %v267
    %v277 = vadd.f32 %v237, %v269
    %v278 = vadd.f32 %v238, %v270
    %v279 = vadd.f32 %v239, %v271
    %v280 = vadd.f32 %v240, %v272
    %v281 = vadd.f32 %v241, %v273
    %v282 = vadd.f32 %v242, %v274
    %v283 = vadd.f32 %v243, %v275
    %v284 = vadd.f32 %v244, %v276
    %v285 = vlaneseq
    %v286 = vshrl.u32 %v285, 7
    %v287 = vsub.s32 5, %v286
    %v288 = vrot.slane %v55, %v287
    %v289 = vlaneseq
    %v290 = vshrl.u32 %v289, 7
    %v291 = vsub.s32 5, %v290
    %v292 = vrot.slane %v56, %v291
    %v293 = vlaneseq
    %v294 = vshrl.u32 %v293, 7
    %v295 = vsub.s32 5, %v294
    %v296 = vrot.slane %v57, %v295
    %v297 = vlaneseq
    %v298 = vshrl.u32 %v297, 7
    %v299 = vsub.s32 5, %v298
    %v300 = vrot.slane %v58, %v299
    %301 = vset.pattern.permute.xlu0 5
    %302 = vperm.xlu0 %301, %v16
    %v303 = vpop.permute.xlu0 %302
    %305 = vset.pattern.permute.xlu0 5
    %306 = vperm.xlu0 %305, %v17
    %v307 = vpop.permute.xlu0 %306
    %v309 = vmul.f32 %v288, %v303
    %v310 = vmul.f32 %v288, %v307
    %v311 = vmul.f32 %v292, %v303
    %v312 = vmul.f32 %v292, %v307
    %v313 = vmul.f32 %v296, %v303
    %v314 = vmul.f32 %v296, %v307
    %v315 = vmul.f32 %v300, %v303
    %v316 = vmul.f32 %v300, %v307
    %v317 = vadd.f32 %v277, %v309
    %v318 = vadd.f32 %v278, %v310
    %v319 = vadd.f32 %v279, %v311
    %v320 = vadd.f32 %v280, %v312
    %v321 = vadd.f32 %v281, %v313
    %v322 = vadd.f32 %v282, %v314
    %v323 = vadd.f32 %v283, %v315
    %v324 = vadd.f32 %v284, %v316
    %v325 = vlaneseq
    %v326 = vshrl.u32 %v325, 7
    %v327 = vsub.s32 7, %v326
    %v328 = vrot.slane %v55, %v327
    %v329 = vlaneseq
    %v330 = vshrl.u32 %v329, 7
    %v331 = vsub.s32 7, %v330
    %v332 = vrot.slane %v56, %v331
    %v333 = vlaneseq
    %v334 = vshrl.u32 %v333, 7
    %v335 = vsub.s32 7, %v334
    %v336 = vrot.slane %v57, %v335
    %v337 = vlaneseq
    %v338 = vshrl.u32 %v337, 7
    %v339 = vsub.s32 7, %v338
    %v340 = vrot.slane %v58, %v339
    %341 = vset.pattern.permute.xlu0 7
    %342 = vperm.xlu0 %341, %v16
    %v343 = vpop.permute.xlu0 %342
    %345 = vset.pattern.permute.xlu0 7
    %346 = vperm.xlu0 %345, %v17
    %v347 = vpop.permute.xlu0 %346
    %v349 = vmul.f32 %v328, %v343
    %v350 = vmul.f32 %v328, %v347
    %v351 = vmul.f32 %v332, %v343
    %v352 = vmul.f32 %v332, %v347
    %v353 = vmul.f32 %v336, %v343
    %v354 = vmul.f32 %v336, %v347
    %v355 = vmul.f32 %v340, %v343
    %v356 = vmul.f32 %v340, %v347
    %v357 = vadd.f32 %v317, %v349
    %v358 = vadd.f32 %v318, %v350
    %v359 = vadd.f32 %v319, %v351
    %v360 = vadd.f32 %v320, %v352
    %v361 = vadd.f32 %v321, %v353
    %v362 = vadd.f32 %v322, %v354
    %v363 = vadd.f32 %v323, %v355
    %v364 = vadd.f32 %v324, %v356
    %v365 = vadd.f32 %v205, %v357
    %v366 = vadd.f32 %v206, %v358
    %v367 = vadd.f32 %v207, %v359
    %v368 = vadd.f32 %v208, %v360
    %v369 = vadd.f32 %v209, %v361
    %v370 = vadd.f32 %v210, %v362
    %v371 = vadd.f32 %v211, %v363
    %v372 = vadd.f32 %v212, %v364
    %373 = vset.pattern.permute.xlu0 8
    %374 = vperm.xlu0 %373, %v16
    %v375 = vpop.permute.xlu0 %374
    %377 = vset.pattern.permute.xlu0 8
    %378 = vperm.xlu0 %377, %v17
    %v379 = vpop.permute.xlu0 %378
    %v381 = vadd.f32 %v365, %v375
    %v382 = vadd.f32 %v366, %v379
    %v383 = vadd.f32 %v367, %v375
    %v384 = vadd.f32 %v368, %v379
    %v385 = vadd.f32 %v369, %v375
    %v386 = vadd.f32 %v370, %v379
    %v387 = vadd.f32 %v371, %v375
    %v388 = vadd.f32 %v372, %v379
    %v389 = vmax.f32 %v381, %v385
    %v390 = vmax.f32 %v382, %v386
    %v391 = vmax.f32 %v383, %v387
    %v392 = vmax.f32 %v384, %v388
    %393 = vst [vmem:[#allocation2] sm:$0xff] %v389
    %394 = vst [vmem:[#allocation2 + $0x8] sm:$0xff] %v390
    %395 = vst [vmem:[#allocation2 + $0x10] sm:$0xff] %v391
    %396 = vst [vmem:[#allocation2 + $0x18] sm:$0xff] %v392
    // Predicated region
    $region14: #{transition_block.1} parent=1 // pred_check
      _
    $region15: #{transition_block.1} parent=1 // pred_check_branch
      %398 = sbr.rel (0) target = $region17
    $region16: #{transition_block.1} parent=1 // pred_region
      %s400 = ssub.s32 512, 512
      %401 = vsyncadd [#allocation3], %s400
      %s402 = sshll.u32 [#allocation2], 4
      %s403 = int_to_ptr.vmem [resolvable:$true] %s402
      %408 = dma.vmem_to_hbm [thread:$0]  %s403, 512, %s3, [#allocation3], 128, 128, 8
    $region17: #{transition_block.1} parent=1 // pred_fallthru
      _
    // Predicated region
    $region18: #{transition_block.1} parent=1 // pred_check
      _
    $region19: #{transition_block.1} parent=1 // pred_check_branch
      %410 = sbr.rel (0) target = $region21
    $region20: #{transition_block.1} parent=1 // pred_region
      %411 = dma.done [#allocation3], 512
    $region21: #{transition_block.1} parent=1 // pred_fallthru
      _
    %412 = vsyncpa [#allocation3], 1

</llo_original>
